<compile_context>
chip_gen: v5e
topology: v5e:2x2
jax: 0.10.0
libtpu: 0.0.40
codegen_flags: <defaults>
</compile_context>

<pallas_src>
import numpy as np
import jax
import jax.numpy as jnp
from jax.experimental import pallas as pl
from jax.experimental.pallas import tpu as pltpu

PAD = 128  # lane-dense feature width carried through the fused kernel
BF16 = jnp.bfloat16


# ----------------------------------------------------------------------------
# Helper reproduced from the reference code (pure python / numpy).
# ----------------------------------------------------------------------------
def get_node_config(inp, hLayerCount, minP=2, maxP=7):
    P = int(np.ceil(np.log2(inp)))
    maxLayerNodeP = min(int((hLayerCount + minP + P) / 2), maxP)
    if maxLayerNodeP <= P:
        maxLayerNodeP = P + 1
    incrP = maxLayerNodeP - P
    dcrP = min(maxLayerNodeP - minP + 1, hLayerCount - incrP)
    sameP = 0
    if hLayerCount > incrP + dcrP:
        sameP = hLayerCount - incrP - dcrP
    layer = []
    for _ in range(incrP):
        layer.append(2 ** P)
        P += 1
    for _ in range(sameP):
        layer.append(2 ** P)
    for _ in range(dcrP):
        layer.append(2 ** P)
        P -= 1
    return layer


# ----------------------------------------------------------------------------
# Per-generation VMEM budget (~75% of physical VMEM, fallback 48 MiB).
# ----------------------------------------------------------------------------
def _vmem_limit_bytes():
    try:
        info = pltpu.get_tpu_info()
        cap = getattr(info, "vmem_capacity_bytes", None)
        if cap is None or cap <= 0:
            raise ValueError("no vmem_capacity_bytes")
        return int(cap) * 3 // 4
    except Exception:
        return 48 * 1024 * 1024


# ----------------------------------------------------------------------------
# Single fused Pallas kernel (whole operands resident in VMEM, no grid).
# ----------------------------------------------------------------------------
_VMEM = pl.BlockSpec(memory_space=pltpu.MemorySpace.VMEM)


def _make_fused_kernel(n_gcn, n_fc_hidden):
    """Kernel computing the entire GCN forward pass.

    Args (refs):
      a_ref  : [N, N]   bf16   normalized adjacency A_hat
      x_ref  : [N, PAD] bf16   node features (zero-padded to PAD lanes)
      p_ref  : [G, N]   bf16   mean-pool matrix
      gw_ref : [Lg, PAD, PAD] bf16  stacked (zero-padded) GCN weights
      gb_ref : [Lg, PAD]      f32   stacked GCN biases
      fw_ref : [Lf, PAD, PAD] bf16  stacked FC weights (last = final linear)
      fb_ref : [Lf, PAD]      f32   stacked FC biases
      o_ref  : [G, PAD] f32   output slab (column 0 is the real scalar output)
    """
    def kernel(a_ref, x_ref, p_ref, gw_ref, gb_ref, fw_ref, fb_ref, o_ref):
        a = a_ref[...]                     # bf16
        h = x_ref[...]                     # bf16
        # GCN conv stack: relu(A_hat @ (H @ W_l) + b_l)   (unrolled, static L)
        for l in range(n_gcn):
            xw = jnp.dot(h, gw_ref[l], preferred_element_type=jnp.float32)
            ah = jnp.dot(a, xw.astype(BF16), preferred_element_type=jnp.float32)
            h = jnp.maximum(ah + gb_ref[l:l + 1, :], 0.0).astype(BF16)
        # global mean pool: P @ H
        g = jnp.dot(p_ref[...], h, preferred_element_type=jnp.float32).astype(BF16)
        # hidden FC layers + ReLU
        for l in range(n_fc_hidden):
            z = jnp.dot(g, fw_ref[l], preferred_element_type=jnp.float32) + fb_ref[l:l + 1, :]
            g = jnp.maximum(z, 0.0).astype(BF16)
        # final linear (no ReLU), f32 output
        l = n_fc_hidden
        o_ref[...] = jnp.dot(g, fw_ref[l], preferred_element_type=jnp.float32) + fb_ref[l:l + 1, :]

    return kernel


def gcn_forward(params, x_pad, a_hat, pool_mat):
    n_gcn = params["gcn_w"].shape[0]
    n_fc = params["fc_w"].shape[0]
    num_graphs, num_nodes = pool_mat.shape

    # Advisory cost hint for XLA's scheduler (kernel is latency-bound at toy size).
    flops = (2 * n_gcn * (num_nodes * PAD * PAD + num_nodes * num_nodes * PAD)
             + 2 * num_graphs * num_nodes * PAD
             + 2 * n_fc * num_graphs * PAD * PAD)
    operands = (a_hat, x_pad, pool_mat,
                params["gcn_w"], params["gcn_b"], params["fc_w"], params["fc_b"])
    bytes_accessed = sum(int(np.prod(o.shape)) * o.dtype.itemsize for o in operands)
    bytes_accessed += num_graphs * PAD * 4  # output slab
    cost = pl.CostEstimate(flops=flops, transcendentals=0,
                           bytes_accessed=bytes_accessed)

    out = pl.pallas_call(
        _make_fused_kernel(n_gcn, n_fc - 1),
        out_shape=jax.ShapeDtypeStruct((num_graphs, PAD), jnp.float32),
        in_specs=[_VMEM] * 7,
        out_specs=_VMEM,
        compiler_params=pltpu.CompilerParams(vmem_limit_bytes=_vmem_limit_bytes()),
        cost_estimate=cost,
    )(*operands)
    # column 0 holds the real scalar output (padded columns are exact zeros)
    return out[:, 0]


# ----------------------------------------------------------------------------
# Graph preprocessing + parameter construction (plain JAX / numpy).
# ----------------------------------------------------------------------------
def build_norm_adj(edge_index, num_nodes):
    """GCNConv normalization: D^{-1/2} (A + I) D^{-1/2}, A[dst, src] = 1."""
    src = np.asarray(edge_index[0])
    dst = np.asarray(edge_index[1])
    a = np.zeros((num_nodes, num_nodes), np.float32)
    a[dst, src] = 1.0
    a = a + np.eye(num_nodes, dtype=np.float32)  # self loops
    deg = a.sum(axis=1)
    d_inv_sqrt = 1.0 / np.sqrt(np.maximum(deg, 1.0))
    return d_inv_sqrt[:, None] * a * d_inv_sqrt[None, :]


def build_mean_pool_matrix(batch, num_graphs):
    """P[g, n] = 1 / |nodes in graph g| if batch[n] == g else 0."""
    batch = np.asarray(batch)
    onehot = (batch[None, :] == np.arange(num_graphs)[:, None]).astype(np.float32)
    counts = np.maximum(onehot.sum(axis=1, keepdims=True), 1.0)
    return onehot / counts


def _pad2d(w, rows, cols):
    out = np.zeros((rows, cols), np.float32)
    out[: w.shape[0], : w.shape[1]] = np.asarray(w)
    return out


def _pad1d(b, cols):
    out = np.zeros((cols,), np.float32)
    out[: b.shape[0]] = np.asarray(b)
    return out


def glorot(key, shape):
    fan_in, fan_out = shape
    limit = np.sqrt(6.0 / (fan_in + fan_out))
    return jax.random.uniform(key, shape, jnp.float32, -limit, limit)


def init_params(key, node_feature_count, hidden_channels, conv_layer_count,
                fc_layer_count):
    """Builds stacked, 128-padded parameter slabs plus the unpadded originals."""
    raw_gcn, raw_fc = [], []

    dims = [node_feature_count] + [hidden_channels] * conv_layer_count
    for i in range(conv_layer_count):
        key, kw = jax.random.split(key)
        w = glorot(kw, (dims[i], dims[i + 1]))
        b = jnp.zeros((dims[i + 1],), jnp.float32)
        raw_gcn.append((w, b))

    layer_config = get_node_config(hidden_channels, fc_layer_count)
    prev = hidden_channels
    for n_out in layer_config + [1]:
        key, kw, kb = jax.random.split(key, 3)
        bound = 1.0 / np.sqrt(prev)
        w = jax.random.uniform(kw, (prev, n_out), jnp.float32, -bound, bound)
        b = jax.random.uniform(kb, (n_out,), jnp.float32, -bound, bound)
        raw_fc.append((w, b))
        prev = n_out

    # Weights as bf16 (MXU operands), biases in f32 (VPU epilogue).
    gcn_w = jnp.asarray(np.stack([_pad2d(w, PAD, PAD) for (w, _) in raw_gcn]),
                        dtype=BF16)
    gcn_b = jnp.asarray(np.stack([_pad1d(b, PAD) for (_, b) in raw_gcn]),
                        dtype=jnp.float32)
    fc_w = jnp.asarray(np.stack([_pad2d(w, PAD, PAD) for (w, _) in raw_fc]),
                       dtype=BF16)
    fc_b = jnp.asarray(np.stack([_pad1d(b, PAD) for (_, b) in raw_fc]),
                       dtype=jnp.float32)

    return {"gcn_w": gcn_w, "gcn_b": gcn_b, "fc_w": fc_w, "fc_b": fc_b,
            "raw_gcn": raw_gcn, "raw_fc": raw_fc}


def reference_forward_bf16(params, x, a_hat_f32, pool_f32):
    """Pure-JAX reference with the SAME bf16 casts as the kernel (unpadded)."""
    a = jnp.asarray(a_hat_f32, dtype=BF16)
    p = jnp.asarray(pool_f32, dtype=BF16)
    h = x.astype(BF16)
    for (w, b) in params["raw_gcn"]:
        xw = jnp.dot(h, w.astype(BF16), preferred_element_type=jnp.float32)
        ah = jnp.dot(a, xw.astype(BF16), preferred_element_type=jnp.float32)
        h = jnp.maximum(ah + b[None, :], 0.0).astype(BF16)
    g = jnp.dot(p, h, preferred_element_type=jnp.float32).astype(BF16)
    for (w, b) in params["raw_fc"][:-1]:
        z = jnp.dot(g, w.astype(BF16), preferred_element_type=jnp.float32) + b[None, :]
        g = jnp.maximum(z, 0.0).astype(BF16)
    w, b = params["raw_fc"][-1]
    return jnp.squeeze(jnp.dot(g, w.astype(BF16),
                               preferred_element_type=jnp.float32) + b[None, :])


# ----------------------------------------------------------------------------
# Driver
# ----------------------------------------------------------------------------
if __name__ == "__main__":
    NODE_FEATURES = 4
    HIDDEN = 32
    CONV_LAYERS = 3
    FC_LAYERS = 5
    NUM_NODES = 16          # 2 graphs x 8 nodes
    NUM_GRAPHS = 2

    key = jax.random.PRNGKey(0)
    key, kx = jax.random.split(key)

    # Node features (zero-padded to 128 lanes, stored bf16 for the kernel)
    x = jax.random.normal(kx, (NUM_NODES, NODE_FEATURES), jnp.float32)
    x_pad_np = np.zeros((NUM_NODES, PAD), np.float32)
    x_pad_np[:, :NODE_FEATURES] = np.asarray(x)
    x_pad = jnp.asarray(x_pad_np, dtype=BF16)

    # batch assignment: nodes 0..7 -> graph 0, nodes 8..15 -> graph 1
    batch = np.array([0] * 8 + [1] * 8, dtype=np.int32)

    # Deterministic edges: within each graph a ring plus a skip connection (both dirs).
    src_list, dst_list = [], []
    for g in range(NUM_GRAPHS):
        base = g * 8
        for i in range(8):
            for j in (1, 3):
                s, d = base + i, base + (i + j) % 8
                src_list += [s, d]
                dst_list += [d, s]
    edge_index = np.array([src_list, dst_list], dtype=np.int32)

    a_hat_f32 = build_norm_adj(edge_index, NUM_NODES)
    pool_f32 = build_mean_pool_matrix(batch, NUM_GRAPHS)
    a_hat = jnp.asarray(a_hat_f32, dtype=BF16)
    pool_mat = jnp.asarray(pool_f32, dtype=BF16)

    params = init_params(jax.random.PRNGKey(42), NODE_FEATURES, HIDDEN,
                         CONV_LAYERS, FC_LAYERS)

    fwd = jax.jit(gcn_forward)
    out = jax.block_until_ready(fwd(params, x_pad, a_hat, pool_mat))

    assert out.shape == (NUM_GRAPHS,), out.shape
    assert jnp.all(jnp.isfinite(out))

    # Compare against a pure-JAX reference with identical bf16 casts.
    ref = reference_forward_bf16(params, x, a_hat_f32, pool_f32)
    np.testing.assert_allclose(np.asarray(out), np.asarray(ref),
                               rtol=2e-2, atol=2e-2)

    print("KERNEL_OK")
</pallas_src>

<mosaic_0001>
module attributes {stable_mosaic.version = 11 : i64} {
  func.func @kernel(%arg0: memref<16x16xbf16, #tpu.memory_space<vmem>>, %arg1: memref<16x128xbf16, #tpu.memory_space<vmem>>, %arg2: memref<2x16xbf16, #tpu.memory_space<vmem>>, %arg3: memref<3x128x128xbf16, #tpu.memory_space<vmem>>, %arg4: memref<3x128xf32, #tpu.memory_space<vmem>>, %arg5: memref<6x128x128xbf16, #tpu.memory_space<vmem>>, %arg6: memref<6x128xf32, #tpu.memory_space<vmem>>, %arg7: memref<2x128xf32, #tpu.memory_space<vmem>>) attributes {dimension_semantics = [], scalar_prefetch = 0 : i64, scratch_operands = 0 : i64, tpu.core_type = #tpu.core_type<tc>} {
    %c0 = arith.constant 0 : index
    %c0_0 = arith.constant 0 : index
    %0 = vector.load %arg0[%c0, %c0_0] : memref<16x16xbf16, #tpu.memory_space<vmem>>, vector<16x16xbf16>
    %c0_1 = arith.constant 0 : index
    %c0_2 = arith.constant 0 : index
    %1 = vector.load %arg1[%c0_1, %c0_2] : memref<16x128xbf16, #tpu.memory_space<vmem>>, vector<16x128xbf16>
    %c0_3 = arith.constant 0 : index
    %c0_4 = arith.constant 0 : index
    %c0_5 = arith.constant 0 : index
    %2 = vector.load %arg3[%c0_3, %c0_4, %c0_5] : memref<3x128x128xbf16, #tpu.memory_space<vmem>>, vector<1x128x128xbf16>
    %3 = vector.shape_cast %2 : vector<1x128x128xbf16> to vector<128x128xbf16>
    %cst = arith.constant dense<0.000000e+00> : vector<16x128xf32>
    %4 = tpu.matmul %1, %3, %cst {dimension_numbers = #tpu.dot_dimension_numbers<[1], [0], [0], [1], [0, 0, 1, 1], [], []>} : vector<16x128xbf16>, vector<128x128xbf16>, vector<16x128xf32> -> vector<16x128xf32>
    %5 = arith.truncf %4 : vector<16x128xf32> to vector<16x128xbf16>
    %cst_6 = arith.constant dense<0.000000e+00> : vector<16x128xf32>
    %6 = tpu.matmul %0, %5, %cst_6 {dimension_numbers = #tpu.dot_dimension_numbers<[1], [0], [0], [1], [0, 0, 1, 1], [], []>} : vector<16x16xbf16>, vector<16x128xbf16>, vector<16x128xf32> -> vector<16x128xf32>
    %c0_7 = arith.constant 0 : index
    %c0_8 = arith.constant 0 : index
    %7 = vector.load %arg4[%c0_7, %c0_8] : memref<3x128xf32, #tpu.memory_space<vmem>>, vector<1x128xf32>
    %8 = vector.broadcast %7 : vector<1x128xf32> to vector<16x128xf32>
    %9 = arith.addf %6, %8 : vector<16x128xf32>
    %cst_9 = arith.constant 0.000000e+00 : f32
    %10 = vector.broadcast %cst_9 : f32 to vector<16x128xf32>
    %11 = arith.maximumf %9, %10 : vector<16x128xf32>
    %12 = arith.truncf %11 : vector<16x128xf32> to vector<16x128xbf16>
    %c1 = arith.constant 1 : index
    %c0_10 = arith.constant 0 : index
    %c0_11 = arith.constant 0 : index
    %13 = vector.load %arg3[%c1, %c0_10, %c0_11] : memref<3x128x128xbf16, #tpu.memory_space<vmem>>, vector<1x128x128xbf16>
    %14 = vector.shape_cast %13 : vector<1x128x128xbf16> to vector<128x128xbf16>
    %cst_12 = arith.constant dense<0.000000e+00> : vector<16x128xf32>
    %15 = tpu.matmul %12, %14, %cst_12 {dimension_numbers = #tpu.dot_dimension_numbers<[1], [0], [0], [1], [0, 0, 1, 1], [], []>} : vector<16x128xbf16>, vector<128x128xbf16>, vector<16x128xf32> -> vector<16x128xf32>
    %16 = arith.truncf %15 : vector<16x128xf32> to vector<16x128xbf16>
    %cst_13 = arith.constant dense<0.000000e+00> : vector<16x128xf32>
    %17 = tpu.matmul %0, %16, %cst_13 {dimension_numbers = #tpu.dot_dimension_numbers<[1], [0], [0], [1], [0, 0, 1, 1], [], []>} : vector<16x16xbf16>, vector<16x128xbf16>, vector<16x128xf32> -> vector<16x128xf32>
    %c1_14 = arith.constant 1 : index
    %c0_15 = arith.constant 0 : index
    %18 = vector.load %arg4[%c1_14, %c0_15] : memref<3x128xf32, #tpu.memory_space<vmem>>, vector<1x128xf32>
    %19 = vector.broadcast %18 : vector<1x128xf32> to vector<16x128xf32>
    %20 = arith.addf %17, %19 : vector<16x128xf32>
    %cst_16 = arith.constant 0.000000e+00 : f32
    %21 = vector.broadcast %cst_16 : f32 to vector<16x128xf32>
    %22 = arith.maximumf %20, %21 : vector<16x128xf32>
    %23 = arith.truncf %22 : vector<16x128xf32> to vector<16x128xbf16>
    %c2 = arith.constant 2 : index
    %c0_17 = arith.constant 0 : index
    %c0_18 = arith.constant 0 : index
    %24 = vector.load %arg3[%c2, %c0_17, %c0_18] : memref<3x128x128xbf16, #tpu.memory_space<vmem>>, vector<1x128x128xbf16>
    %25 = vector.shape_cast %24 : vector<1x128x128xbf16> to vector<128x128xbf16>
    %cst_19 = arith.constant dense<0.000000e+00> : vector<16x128xf32>
    %26 = tpu.matmul %23, %25, %cst_19 {dimension_numbers = #tpu.dot_dimension_numbers<[1], [0], [0], [1], [0, 0, 1, 1], [], []>} : vector<16x128xbf16>, vector<128x128xbf16>, vector<16x128xf32> -> vector<16x128xf32>
    %27 = arith.truncf %26 : vector<16x128xf32> to vector<16x128xbf16>
    %cst_20 = arith.constant dense<0.000000e+00> : vector<16x128xf32>
    %28 = tpu.matmul %0, %27, %cst_20 {dimension_numbers = #tpu.dot_dimension_numbers<[1], [0], [0], [1], [0, 0, 1, 1], [], []>} : vector<16x16xbf16>, vector<16x128xbf16>, vector<16x128xf32> -> vector<16x128xf32>
    %c2_21 = arith.constant 2 : index
    %c0_22 = arith.constant 0 : index
    %29 = vector.load %arg4[%c2_21, %c0_22] : memref<3x128xf32, #tpu.memory_space<vmem>>, vector<1x128xf32>
    %30 = vector.broadcast %29 : vector<1x128xf32> to vector<16x128xf32>
    %31 = arith.addf %28, %30 : vector<16x128xf32>
    %cst_23 = arith.constant 0.000000e+00 : f32
    %32 = vector.broadcast %cst_23 : f32 to vector<16x128xf32>
    %33 = arith.maximumf %31, %32 : vector<16x128xf32>
    %34 = arith.truncf %33 : vector<16x128xf32> to vector<16x128xbf16>
    %c0_24 = arith.constant 0 : index
    %c0_25 = arith.constant 0 : index
    %35 = vector.load %arg2[%c0_24, %c0_25] : memref<2x16xbf16, #tpu.memory_space<vmem>>, vector<2x16xbf16>
    %cst_26 = arith.constant dense<0.000000e+00> : vector<2x128xf32>
    %36 = tpu.matmul %35, %34, %cst_26 {dimension_numbers = #tpu.dot_dimension_numbers<[1], [0], [0], [1], [0, 0, 1, 1], [], []>} : vector<2x16xbf16>, vector<16x128xbf16>, vector<2x128xf32> -> vector<2x128xf32>
    %37 = arith.truncf %36 : vector<2x128xf32> to vector<2x128xbf16>
    %c0_27 = arith.constant 0 : index
    %c0_28 = arith.constant 0 : index
    %c0_29 = arith.constant 0 : index
    %38 = vector.load %arg5[%c0_27, %c0_28, %c0_29] : memref<6x128x128xbf16, #tpu.memory_space<vmem>>, vector<1x128x128xbf16>
    %39 = vector.shape_cast %38 : vector<1x128x128xbf16> to vector<128x128xbf16>
    %cst_30 = arith.constant dense<0.000000e+00> : vector<2x128xf32>
    %40 = tpu.matmul %37, %39, %cst_30 {dimension_numbers = #tpu.dot_dimension_numbers<[1], [0], [0], [1], [0, 0, 1, 1], [], []>} : vector<2x128xbf16>, vector<128x128xbf16>, vector<2x128xf32> -> vector<2x128xf32>
    %c0_31 = arith.constant 0 : index
    %c0_32 = arith.constant 0 : index
    %41 = vector.load %arg6[%c0_31, %c0_32] : memref<6x128xf32, #tpu.memory_space<vmem>>, vector<1x128xf32>
    %42 = vector.broadcast %41 : vector<1x128xf32> to vector<2x128xf32>
    %43 = arith.addf %40, %42 : vector<2x128xf32>
    %cst_33 = arith.constant 0.000000e+00 : f32
    %44 = vector.broadcast %cst_33 : f32 to vector<2x128xf32>
    %45 = arith.maximumf %43, %44 : vector<2x128xf32>
    %46 = arith.truncf %45 : vector<2x128xf32> to vector<2x128xbf16>
    %c1_34 = arith.constant 1 : index
    %c0_35 = arith.constant 0 : index
    %c0_36 = arith.constant 0 : index
    %47 = vector.load %arg5[%c1_34, %c0_35, %c0_36] : memref<6x128x128xbf16, #tpu.memory_space<vmem>>, vector<1x128x128xbf16>
    %48 = vector.shape_cast %47 : vector<1x128x128xbf16> to vector<128x128xbf16>
    %cst_37 = arith.constant dense<0.000000e+00> : vector<2x128xf32>
    %49 = tpu.matmul %46, %48, %cst_37 {dimension_numbers = #tpu.dot_dimension_numbers<[1], [0], [0], [1], [0, 0, 1, 1], [], []>} : vector<2x128xbf16>, vector<128x128xbf16>, vector<2x128xf32> -> vector<2x128xf32>
    %c1_38 = arith.constant 1 : index
    %c0_39 = arith.constant 0 : index
    %50 = vector.load %arg6[%c1_38, %c0_39] : memref<6x128xf32, #tpu.memory_space<vmem>>, vector<1x128xf32>
    %51 = vector.broadcast %50 : vector<1x128xf32> to vector<2x128xf32>
    %52 = arith.addf %49, %51 : vector<2x128xf32>
    %cst_40 = arith.constant 0.000000e+00 : f32
    %53 = vector.broadcast %cst_40 : f32 to vector<2x128xf32>
    %54 = arith.maximumf %52, %53 : vector<2x128xf32>
    %55 = arith.truncf %54 : vector<2x128xf32> to vector<2x128xbf16>
    %c2_41 = arith.constant 2 : index
    %c0_42 = arith.constant 0 : index
    %c0_43 = arith.constant 0 : index
    %56 = vector.load %arg5[%c2_41, %c0_42, %c0_43] : memref<6x128x128xbf16, #tpu.memory_space<vmem>>, vector<1x128x128xbf16>
    %57 = vector.shape_cast %56 : vector<1x128x128xbf16> to vector<128x128xbf16>
    %cst_44 = arith.constant dense<0.000000e+00> : vector<2x128xf32>
    %58 = tpu.matmul %55, %57, %cst_44 {dimension_numbers = #tpu.dot_dimension_numbers<[1], [0], [0], [1], [0, 0, 1, 1], [], []>} : vector<2x128xbf16>, vector<128x128xbf16>, vector<2x128xf32> -> vector<2x128xf32>
    %c2_45 = arith.constant 2 : index
    %c0_46 = arith.constant 0 : index
    %59 = vector.load %arg6[%c2_45, %c0_46] : memref<6x128xf32, #tpu.memory_space<vmem>>, vector<1x128xf32>
    %60 = vector.broadcast %59 : vector<1x128xf32> to vector<2x128xf32>
    %61 = arith.addf %58, %60 : vector<2x128xf32>
    %cst_47 = arith.constant 0.000000e+00 : f32
    %62 = vector.broadcast %cst_47 : f32 to vector<2x128xf32>
    %63 = arith.maximumf %61, %62 : vector<2x128xf32>
    %64 = arith.truncf %63 : vector<2x128xf32> to vector<2x128xbf16>
    %c3 = arith.constant 3 : index
    %c0_48 = arith.constant 0 : index
    %c0_49 = arith.constant 0 : index
    %65 = vector.load %arg5[%c3, %c0_48, %c0_49] : memref<6x128x128xbf16, #tpu.memory_space<vmem>>, vector<1x128x128xbf16>
    %66 = vector.shape_cast %65 : vector<1x128x128xbf16> to vector<128x128xbf16>
    %cst_50 = arith.constant dense<0.000000e+00> : vector<2x128xf32>
    %67 = tpu.matmul %64, %66, %cst_50 {dimension_numbers = #tpu.dot_dimension_numbers<[1], [0], [0], [1], [0, 0, 1, 1], [], []>} : vector<2x128xbf16>, vector<128x128xbf16>, vector<2x128xf32> -> vector<2x128xf32>
    %c3_51 = arith.constant 3 : index
    %c0_52 = arith.constant 0 : index
    %68 = vector.load %arg6[%c3_51, %c0_52] : memref<6x128xf32, #tpu.memory_space<vmem>>, vector<1x128xf32>
    %69 = vector.broadcast %68 : vector<1x128xf32> to vector<2x128xf32>
    %70 = arith.addf %67, %69 : vector<2x128xf32>
    %cst_53 = arith.constant 0.000000e+00 : f32
    %71 = vector.broadcast %cst_53 : f32 to vector<2x128xf32>
    %72 = arith.maximumf %70, %71 : vector<2x128xf32>
    %73 = arith.truncf %72 : vector<2x128xf32> to vector<2x128xbf16>
    %c4 = arith.constant 4 : index
    %c0_54 = arith.constant 0 : index
    %c0_55 = arith.constant 0 : index
    %74 = vector.load %arg5[%c4, %c0_54, %c0_55] : memref<6x128x128xbf16, #tpu.memory_space<vmem>>, vector<1x128x128xbf16>
    %75 = vector.shape_cast %74 : vector<1x128x128xbf16> to vector<128x128xbf16>
    %cst_56 = arith.constant dense<0.000000e+00> : vector<2x128xf32>
    %76 = tpu.matmul %73, %75, %cst_56 {dimension_numbers = #tpu.dot_dimension_numbers<[1], [0], [0], [1], [0, 0, 1, 1], [], []>} : vector<2x128xbf16>, vector<128x128xbf16>, vector<2x128xf32> -> vector<2x128xf32>
    %c4_57 = arith.constant 4 : index
    %c0_58 = arith.constant 0 : index
    %77 = vector.load %arg6[%c4_57, %c0_58] : memref<6x128xf32, #tpu.memory_space<vmem>>, vector<1x128xf32>
    %78 = vector.broadcast %77 : vector<1x128xf32> to vector<2x128xf32>
    %79 = arith.addf %76, %78 : vector<2x128xf32>
    %cst_59 = arith.constant 0.000000e+00 : f32
    %80 = vector.broadcast %cst_59 : f32 to vector<2x128xf32>
    %81 = arith.maximumf %79, %80 : vector<2x128xf32>
    %82 = arith.truncf %81 : vector<2x128xf32> to vector<2x128xbf16>
    %c5 = arith.constant 5 : index
    %c0_60 = arith.constant 0 : index
    %c0_61 = arith.constant 0 : index
    %83 = vector.load %arg5[%c5, %c0_60, %c0_61] : memref<6x128x128xbf16, #tpu.memory_space<vmem>>, vector<1x128x128xbf16>
    %84 = vector.shape_cast %83 : vector<1x128x128xbf16> to vector<128x128xbf16>
    %cst_62 = arith.constant dense<0.000000e+00> : vector<2x128xf32>
    %85 = tpu.matmul %82, %84, %cst_62 {dimension_numbers = #tpu.dot_dimension_numbers<[1], [0], [0], [1], [0, 0, 1, 1], [], []>} : vector<2x128xbf16>, vector<128x128xbf16>, vector<2x128xf32> -> vector<2x128xf32>
    %c5_63 = arith.constant 5 : index
    %c0_64 = arith.constant 0 : index
    %86 = vector.load %arg6[%c5_63, %c0_64] : memref<6x128xf32, #tpu.memory_space<vmem>>, vector<1x128xf32>
    %87 = vector.broadcast %86 : vector<1x128xf32> to vector<2x128xf32>
    %88 = arith.addf %85, %87 : vector<2x128xf32>
    %c0_65 = arith.constant 0 : index
    %c0_66 = arith.constant 0 : index
    %89 = vector.load %arg7[%c0_65, %c0_66] : memref<2x128xf32, #tpu.memory_space<vmem>>, vector<2x128xf32>
    tpu.vector_store %arg7[%c0_65, %c0_66], %88 {strides = array<i32>} : memref<2x128xf32, #tpu.memory_space<vmem>>, vector<2x128xf32>,
    return
  }
}

</mosaic_0001>

<llo_original>
// kernel: gcn_forward.1
$region0: #{gcn_forward.1}
  #allocation0 [shape = 'u32[]', space=smem, size = 0x4, offset = 0x4, fixed_abs, tag = 'smem constant byte address 0x4 - core index']
  #allocation1 [shape = 'u32[72,128]{1,0:T(1,128)}', space=vmem, size = 0x9000, scoped, tag = 'internal scratch']
  %s0 = inlined_call_operand.hbm [shape: bf16[16,16], index: 0, kind: input, shape index: {}]
  %s1 = inlined_call_operand.hbm [shape: bf16[16,128], index: 1, kind: input, shape index: {}]
  %s2 = inlined_call_operand.vmem [shape: bf16[2,16], index: 2, kind: input, shape index: {}]
  %s3 = inlined_call_operand.hbm [shape: bf16[3,128,128], index: 3, kind: input, shape index: {}]
  %s4 = inlined_call_operand.hbm [shape: f32[3,128], index: 4, kind: input, shape index: {}]
  %s5 = inlined_call_operand.hbm [shape: bf16[6,128,128], index: 5, kind: input, shape index: {}]
  %s6 = inlined_call_operand.hbm [shape: f32[6,128], index: 6, kind: input, shape index: {}]
  %s7 = inlined_call_operand.vmem [shape: f32[2,128], index: 7, kind: output, shape index: {}]
  %s8 = sld [smem:[#allocation0]]
  $region62: #{gcn_forward.1} parent=0
    _
  %s10 = ssub.s32 1, %s8
  %s11 = scalar_select 0, %s10, %s8
  $region1: #{gcn_forward.1} parent=0
    #allocation2 [shape = 'u8[4096]{0}', space=vmem, size = 0x1000, scoped, tag = 'input window, operand 0, single buffered']
    #allocation3 [shape = 's32[1]{0}', space=sflag, size = 0x4, scoped, tag = 'scoped memory for gcn_forward.1']
    #allocation4 [shape = 'u8[4096]{0}', space=vmem, size = 0x1000, scoped, tag = 'input window, operand 1, single buffered']
    #allocation5 [shape = 's32[1]{0}', space=sflag, size = 0x4, scoped, tag = 'scoped memory for gcn_forward.1']
    #allocation6 [shape = 'u8[98304]{0}', space=vmem, size = 0x18000, scoped, tag = 'input window, operand 3, single buffered']
    #allocation7 [shape = 'u8[2048]{0}', space=vmem, size = 0x800, scoped, tag = 'input window, operand 4, single buffered']
    #allocation8 [shape = 's32[1]{0}', space=sflag, size = 0x4, scoped, tag = 'scoped memory for gcn_forward.1']
    #allocation9 [shape = 'u8[196608]{0}', space=vmem, size = 0x30000, scoped, tag = 'input window, operand 5, single buffered']
    #allocation10 [shape = 'u8[4096]{0}', space=vmem, size = 0x1000, scoped, tag = 'input window, operand 6, single buffered']
    #allocation11 [shape = 's32[1]{0}', space=sflag, size = 0x4, scoped, tag = 'scoped memory for gcn_forward.1']
    %12 = vsyncpa [#allocation3], 0
    %13 = vsyncpa [#allocation5], 0
    %14 = vsyncpa [#allocation8], 0
    %15 = vsyncpa [#allocation11], 0
    // Predicated region
    $region2: #{gcn_forward.1} parent=1 // pred_check
      _
    $region3: #{gcn_forward.1} parent=1 // pred_check_branch
      %17 = sbr.rel (0) target = $region5
    $region4: #{gcn_forward.1} parent=1 // pred_region
      %19 = vsyncadd [#allocation3], 0
      %s20 = sshll.u32 %s0, 4
      %s21 = int_to_ptr.hbm [resolvable:$true] %s20
      %s22 = sshll.u32 [#allocation2], 4
      %s23 = int_to_ptr.vmem [resolvable:$true] %s22
      %28 = dma.hbm_to_vmem [thread:$0]  %s21, 128, %s23, [#allocation3], 64, 64, 4
    $region5: #{gcn_forward.1} parent=1 // pred_fallthru
      _
    // Predicated region
    $region6: #{gcn_forward.1} parent=1 // pred_check
      _
    $region7: #{gcn_forward.1} parent=1 // pred_check_branch
      %30 = sbr.rel (0) target = $region9
    $region8: #{gcn_forward.1} parent=1 // pred_region
      %32 = vsyncadd [#allocation5], 0
      %s33 = sshll.u32 %s1, 4
      %s34 = int_to_ptr.hbm [resolvable:$true] %s33
      %s35 = sshll.u32 [#allocation4], 4
      %s36 = int_to_ptr.vmem [resolvable:$true] %s35
      %41 = dma.hbm_to_vmem [thread:$0]  %s34, 128, %s36, [#allocation5], 64, 64, 4
    $region9: #{gcn_forward.1} parent=1 // pred_fallthru
      _
    // Predicated region
    $region10: #{gcn_forward.1} parent=1 // pred_check
      _
    $region11: #{gcn_forward.1} parent=1 // pred_check_branch
      %43 = sbr.rel (0) target = $region13
    $region12: #{gcn_forward.1} parent=1 // pred_region
      _
    $region13: #{gcn_forward.1} parent=1 // pred_fallthru
      _
    // Predicated region
    $region14: #{gcn_forward.1} parent=1 // pred_check
      _
    $region15: #{gcn_forward.1} parent=1 // pred_check_branch
      %45 = sbr.rel (0) target = $region17
    $region16: #{gcn_forward.1} parent=1 // pred_region
      %47 = vsyncadd [#allocation5], 0
      %s48 = sshll.u32 %s3, 4
      %s49 = int_to_ptr.hbm [resolvable:$true] %s48
      %s50 = sshll.u32 [#allocation6], 4
      %s51 = int_to_ptr.vmem [resolvable:$true] %s50
      %56 = dma.hbm_to_vmem [thread:$0]  %s49, 3072, %s51, [#allocation5], 64, 64, 4
    $region17: #{gcn_forward.1} parent=1 // pred_fallthru
      _
    // Predicated region
    $region18: #{gcn_forward.1} parent=1 // pred_check
      _
    $region19: #{gcn_forward.1} parent=1 // pred_check_branch
      %58 = sbr.rel (0) target = $region21
    $region20: #{gcn_forward.1} parent=1 // pred_region
      %60 = vsyncadd [#allocation8], 0
      %s62 = sshll.u32 %s4, 4
      %s63 = int_to_ptr.hbm [resolvable:$true] %s62
      %s64 = sshll.u32 [#allocation7], 4
      %s65 = int_to_ptr.vmem [resolvable:$true] %s64
      %67 = dma.hbm_to_vmem [thread:$0]  %s63, 64, %s65, [#allocation8]
    $region21: #{gcn_forward.1} parent=1 // pred_fallthru
      _
    // Predicated region
    $region22: #{gcn_forward.1} parent=1 // pred_check
      _
    $region23: #{gcn_forward.1} parent=1 // pred_check_branch
      %69 = sbr.rel (0) target = $region25
    $region24: #{gcn_forward.1} parent=1 // pred_region
      %71 = vsyncadd [#allocation8], 0
      %s72 = sshll.u32 %s5, 4
      %s73 = int_to_ptr.hbm [resolvable:$true] %s72
      %s74 = sshll.u32 [#allocation9], 4
      %s75 = int_to_ptr.vmem [resolvable:$true] %s74
      %80 = dma.hbm_to_vmem [thread:$0]  %s73, 6144, %s75, [#allocation8], 64, 64, 4
    $region25: #{gcn_forward.1} parent=1 // pred_fallthru
      _
    // Predicated region
    $region26: #{gcn_forward.1} parent=1 // pred_check
      _
    $region27: #{gcn_forward.1} parent=1 // pred_check_branch
      %82 = sbr.rel (0) target = $region29
    $region28: #{gcn_forward.1} parent=1 // pred_region
      %84 = vsyncadd [#allocation11], 0
      %s86 = sshll.u32 %s6, 4
      %s87 = int_to_ptr.hbm [resolvable:$true] %s86
      %s88 = sshll.u32 [#allocation10], 4
      %s89 = int_to_ptr.vmem [resolvable:$true] %s88
      %91 = dma.hbm_to_vmem [thread:$0]  %s87, 128, %s89, [#allocation11]
    $region29: #{gcn_forward.1} parent=1 // pred_fallthru
      _
    // Predicated region
    $region30: #{gcn_forward.1} parent=1 // pred_check
      _
    $region31: #{gcn_forward.1} parent=1 // pred_check_branch
      %93 = sbr.rel (0) target = $region33
    $region32: #{gcn_forward.1} parent=1 // pred_region
      %95 = dma.done [#allocation3], 128
    $region33: #{gcn_forward.1} parent=1 // pred_fallthru
      _
    // Predicated region
    $region34: #{gcn_forward.1} parent=1 // pred_check
      _
    $region35: #{gcn_forward.1} parent=1 // pred_check_branch
      %97 = sbr.rel (0) target = $region37
    $region36: #{gcn_forward.1} parent=1 // pred_region
      %99 = dma.done [#allocation5], 128
    $region37: #{gcn_forward.1} parent=1 // pred_fallthru
      _
    // Predicated region
    $region38: #{gcn_forward.1} parent=1 // pred_check
      _
    $region39: #{gcn_forward.1} parent=1 // pred_check_branch
      %101 = sbr.rel (0) target = $region41
    $region40: #{gcn_forward.1} parent=1 // pred_region
      %103 = dma.done [#allocation5], 3072
    $region41: #{gcn_forward.1} parent=1 // pred_fallthru
      _
    // Predicated region
    $region42: #{gcn_forward.1} parent=1 // pred_check
      _
    $region43: #{gcn_forward.1} parent=1 // pred_check_branch
      %105 = sbr.rel (0) target = $region45
    $region44: #{gcn_forward.1} parent=1 // pred_region
      %107 = dma.done [#allocation8], 64
    $region45: #{gcn_forward.1} parent=1 // pred_fallthru
      _
    // Predicated region
    $region46: #{gcn_forward.1} parent=1 // pred_check
      _
    $region47: #{gcn_forward.1} parent=1 // pred_check_branch
      %109 = sbr.rel (0) target = $region49
    $region48: #{gcn_forward.1} parent=1 // pred_region
      %111 = dma.done [#allocation8], 6144
    $region49: #{gcn_forward.1} parent=1 // pred_fallthru
      _
    // Predicated region
    $region50: #{gcn_forward.1} parent=1 // pred_check
      _
    $region51: #{gcn_forward.1} parent=1 // pred_check_branch
      %113 = sbr.rel (0) target = $region53
    $region52: #{gcn_forward.1} parent=1 // pred_region
      %115 = dma.done [#allocation11], 128
    $region53: #{gcn_forward.1} parent=1 // pred_fallthru
      _
    %v117 = vld [vmem:[#allocation2] sm:$0xf]
    %v118 = vld [vmem:[#allocation2 + $0x4] sm:$0xf]
    %v119 = vld [vmem:[#allocation4] sm:$0xf]
    %v120 = vld [vmem:[#allocation4 + $0x4] sm:$0xf]
    %v121 = vld [vmem:[#allocation6] sm:$0xf]
    %v122 = vld [vmem:[#allocation6 + $0x4] sm:$0xf]
    %v123 = vld [vmem:[#allocation6 + $0x8] sm:$0xf]
    %v124 = vld [vmem:[#allocation6 + $0xc] sm:$0xf]
    %v125 = vld [vmem:[#allocation6 + $0x10] sm:$0xf]
    %v126 = vld [vmem:[#allocation6 + $0x14] sm:$0xf]
    %v127 = vld [vmem:[#allocation6 + $0x18] sm:$0xf]
    %v128 = vld [vmem:[#allocation6 + $0x1c] sm:$0xf]
    %v129 = vld [vmem:[#allocation6 + $0x20] sm:$0xf]
    %v130 = vld [vmem:[#allocation6 + $0x24] sm:$0xf]
    %v131 = vld [vmem:[#allocation6 + $0x28] sm:$0xf]
    %v132 = vld [vmem:[#allocation6 + $0x2c] sm:$0xf]
    %v133 = vld [vmem:[#allocation6 + $0x30] sm:$0xf]
    %v134 = vld [vmem:[#allocation6 + $0x34] sm:$0xf]
    %v135 = vld [vmem:[#allocation6 + $0x38] sm:$0xf]
    %v136 = vld [vmem:[#allocation6 + $0x3c] sm:$0xf]
    %v139 = vunpack.c.l.b16 %v119
    %v140 = vunpack.c.l.b16 %v120
    %v141 = vpack.c.b16 %v140, %v139
    %v159 = vunpack.c.l.b16 %v121
    %v160 = vunpack.c.l.b16 %v122
    %v161 = vunpack.c.l.b16 %v123
    %v162 = vunpack.c.l.b16 %v124
    %v163 = vunpack.c.l.b16 %v125
    %v164 = vunpack.c.l.b16 %v126
    %v165 = vunpack.c.l.b16 %v127
    %v166 = vunpack.c.l.b16 %v128
    %v167 = vunpack.c.l.b16 %v129
    %v168 = vunpack.c.l.b16 %v130
    %v169 = vunpack.c.l.b16 %v131
    %v170 = vunpack.c.l.b16 %v132
    %v171 = vunpack.c.l.b16 %v133
    %v172 = vunpack.c.l.b16 %v134
    %v173 = vunpack.c.l.b16 %v135
    %v174 = vunpack.c.l.b16 %v136
    %v175 = vpack.c.b16 %v160, %v159
    %v176 = vpack.c.b16 %v162, %v161
    %v177 = vpack.c.b16 %v164, %v163
    %v178 = vpack.c.b16 %v166, %v165
    %v179 = vpack.c.b16 %v168, %v167
    %v180 = vpack.c.b16 %v170, %v169
    %v181 = vpack.c.b16 %v172, %v171
    %v182 = vpack.c.b16 %v174, %v173
    %191 = vmatpush.bf16.msra.mxu0 %v182
    %192 = vmatpush.bf16.msra.mxu0 %v181
    %193 = vmatpush.bf16.msra.mxu0 %v180
    %194 = vmatpush.bf16.msra.mxu0 %v179
    %195 = vmatpush.bf16.msra.mxu0 %v178
    %196 = vmatpush.bf16.msra.mxu0 %v177
    %197 = vmatpush.bf16.msra.mxu0 %v176
    %198 = vmatpush.bf16.msra.mxu0 %v175
    %199 = vmatmul.bf16.gmra.mxu0 %v141
    %v200 = vpop.f32.mrf.mxu0
    %v201 = vadd.f32 0.0, %v200
    %v202 = vpop.f32.mrf.mxu0
    %v203 = vadd.f32 0.0, %v202
    %204 = vdwg.mxu0
    %v205 = vpack.c.bf16 %v203, %v201
    %v206 = vld [vmem:[#allocation7] sm:$0x1]
    %v207 = vperm.slane %v206, 0
    %v210 = vunpack.c.l.b16 %v117
    %v211 = vunpack.c.l.b16 %v118
    %v212 = vpack.c.b16 %v211, %v210
    %vm213 = vcmask 130048
    %v215 = vsel %vm213, %v212, 0
    %217 = vmatpush.bf16.msra.mxu0 0
    %218 = vmatpush.bf16.msra.mxu0 0
    %219 = vmatpush.bf16.msra.mxu0 0
    %220 = vmatpush.bf16.msra.mxu0 0
    %221 = vmatpush.bf16.msra.mxu0 0
    %222 = vmatpush.bf16.msra.mxu0 0
    %223 = vmatpush.bf16.msra.mxu0 0
    %224 = vmatpush.bf16.msra.mxu0 %v205
    %225 = vmatmul.bf16.gmra.mxu0 %v215
    %v226 = vpop.f32.mrf.mxu0
    %v227 = vadd.f32 %v207, %v226
    %v228 = vpop.f32.mrf.mxu0
    %v229 = vadd.f32 %v207, %v228
    %230 = vdwg.mxu0
    %v231 = vmax.f32 %v227, 0.0
    %v232 = vmax.f32 %v229, 0.0
    %v233 = vpack.c.bf16 %v232, %v231
    %s234 = scalar_lea.vmem [#allocation6], 64
    %v235 = vld [vmem:[%s234] sm:$0xf]
    %v236 = vld [vmem:[%s234 + $0x4] sm:$0xf]
    %v237 = vld [vmem:[%s234 + $0x8] sm:$0xf]
    %v238 = vld [vmem:[%s234 + $0xc] sm:$0xf]
    %v239 = vld [vmem:[%s234 + $0x10] sm:$0xf]
    %v240 = vld [vmem:[%s234 + $0x14] sm:$0xf]
    %v241 = vld [vmem:[%s234 + $0x18] sm:$0xf]
    %v242 = vld [vmem:[%s234 + $0x1c] sm:$0xf]
    %v243 = vld [vmem:[%s234 + $0x20] sm:$0xf]
    %v244 = vld [vmem:[%s234 + $0x24] sm:$0xf]
    %v245 = vld [vmem:[%s234 + $0x28] sm:$0xf]
    %v246 = vld [vmem:[%s234 + $0x2c] sm:$0xf]
    %v247 = vld [vmem:[%s234 + $0x30] sm:$0xf]
    %v248 = vld [vmem:[%s234 + $0x34] sm:$0xf]
    %v249 = vld [vmem:[%s234 + $0x38] sm:$0xf]
    %v250 = vld [vmem:[%s234 + $0x3c] sm:$0xf]
    %v267 = vunpack.c.l.b16 %v235
    %v268 = vunpack.c.l.b16 %v236
    %v269 = vunpack.c.l.b16 %v237
    %v270 = vunpack.c.l.b16 %v238
    %v271 = vunpack.c.l.b16 %v239
    %v272 = vunpack.c.l.b16 %v240
    %v273 = vunpack.c.l.b16 %v241
    %v274 = vunpack.c.l.b16 %v242
    %v275 = vunpack.c.l.b16 %v243
    %v276 = vunpack.c.l.b16 %v244
    %v277 = vunpack.c.l.b16 %v245
    %v278 = vunpack.c.l.b16 %v246
    %v279 = vunpack.c.l.b16 %v247
    %v280 = vunpack.c.l.b16 %v248
    %v281 = vunpack.c.l.b16 %v249
    %v282 = vunpack.c.l.b16 %v250
    %v283 = vpack.c.b16 %v268, %v267
    %v284 = vpack.c.b16 %v270, %v269
    %v285 = vpack.c.b16 %v272, %v271
    %v286 = vpack.c.b16 %v274, %v273
    %v287 = vpack.c.b16 %v276, %v275
    %v288 = vpack.c.b16 %v278, %v277
    %v289 = vpack.c.b16 %v280, %v279
    %v290 = vpack.c.b16 %v282, %v281
    %299 = vmatpush.bf16.msra.mxu0 %v290
    %300 = vmatpush.bf16.msra.mxu0 %v289
    %301 = vmatpush.bf16.msra.mxu0 %v288
    %302 = vmatpush.bf16.msra.mxu0 %v287
    %303 = vmatpush.bf16.msra.mxu0 %v286
    %304 = vmatpush.bf16.msra.mxu0 %v285
    %305 = vmatpush.bf16.msra.mxu0 %v284
    %306 = vmatpush.bf16.msra.mxu0 %v283
    %307 = vmatmul.bf16.gmra.mxu0 %v233
    %v308 = vpop.f32.mrf.mxu0
    %v309 = vadd.f32 0.0, %v308
    %v310 = vpop.f32.mrf.mxu0
    %v311 = vadd.f32 0.0, %v310
    %312 = vdwg.mxu0
    %v313 = vpack.c.bf16 %v311, %v309
    %v314 = vld [vmem:[#allocation7 + $0x1] sm:$0x1]
    %v315 = vperm.slane %v314, 0
    %316 = vmatpush.bf16.msra.mxu0 0
    %317 = vmatpush.bf16.msra.mxu0 0
    %318 = vmatpush.bf16.msra.mxu0 0
    %319 = vmatpush.bf16.msra.mxu0 0
    %320 = vmatpush.bf16.msra.mxu0 0
    %321 = vmatpush.bf16.msra.mxu0 0
    %322 = vmatpush.bf16.msra.mxu0 0
    %323 = vmatpush.bf16.msra.mxu0 %v313
    %324 = vmatmul.bf16.gmra.mxu0 %v215
    %v325 = vpop.f32.mrf.mxu0
    %v326 = vadd.f32 %v315, %v325
    %v327 = vpop.f32.mrf.mxu0
    %v328 = vadd.f32 %v315, %v327
    %329 = vdwg.mxu0
    %v330 = vmax.f32 %v326, 0.0
    %v331 = vmax.f32 %v328, 0.0
    %v332 = vpack.c.bf16 %v331, %v330
    %s333 = scalar_lea.vmem [#allocation6], 128
    %v334 = vld [vmem:[%s333] sm:$0xf]
    %v335 = vld [vmem:[%s333 + $0x4] sm:$0xf]
    %v336 = vld [vmem:[%s333 + $0x8] sm:$0xf]
    %v337 = vld [vmem:[%s333 + $0xc] sm:$0xf]
    %v338 = vld [vmem:[%s333 + $0x10] sm:$0xf]
    %v339 = vld [vmem:[%s333 + $0x14] sm:$0xf]
    %v340 = vld [vmem:[%s333 + $0x18] sm:$0xf]
    %v341 = vld [vmem:[%s333 + $0x1c] sm:$0xf]
    %v342 = vld [vmem:[%s333 + $0x20] sm:$0xf]
    %v343 = vld [vmem:[%s333 + $0x24] sm:$0xf]
    %v344 = vld [vmem:[%s333 + $0x28] sm:$0xf]
    %v345 = vld [vmem:[%s333 + $0x2c] sm:$0xf]
    %v346 = vld [vmem:[%s333 + $0x30] sm:$0xf]
    %v347 = vld [vmem:[%s333 + $0x34] sm:$0xf]
    %v348 = vld [vmem:[%s333 + $0x38] sm:$0xf]
    %v349 = vld [vmem:[%s333 + $0x3c] sm:$0xf]
    %v366 = vunpack.c.l.b16 %v334
    %v367 = vunpack.c.l.b16 %v335
    %v368 = vunpack.c.l.b16 %v336
    %v369 = vunpack.c.l.b16 %v337
    %v370 = vunpack.c.l.b16 %v338
    %v371 = vunpack.c.l.b16 %v339
    %v372 = vunpack.c.l.b16 %v340
    %v373 = vunpack.c.l.b16 %v341
    %v374 = vunpack.c.l.b16 %v342
    %v375 = vunpack.c.l.b16 %v343
    %v376 = vunpack.c.l.b16 %v344
    %v377 = vunpack.c.l.b16 %v345
    %v378 = vunpack.c.l.b16 %v346
    %v379 = vunpack.c.l.b16 %v347
    %v380 = vunpack.c.l.b16 %v348
    %v381 = vunpack.c.l.b16 %v349
    %v382 = vpack.c.b16 %v367, %v366
    %v383 = vpack.c.b16 %v369, %v368
    %v384 = vpack.c.b16 %v371, %v370
    %v385 = vpack.c.b16 %v373, %v372
    %v386 = vpack.c.b16 %v375, %v374
    %v387 = vpack.c.b16 %v377, %v376
    %v388 = vpack.c.b16 %v379, %v378
    %v389 = vpack.c.b16 %v381, %v380
    %398 = vmatpush.bf16.msra.mxu0 %v389
    %399 = vmatpush.bf16.msra.mxu0 %v388
    %400 = vmatpush.bf16.msra.mxu0 %v387
    %401 = vmatpush.bf16.msra.mxu0 %v386
    %402 = vmatpush.bf16.msra.mxu0 %v385
    %403 = vmatpush.bf16.msra.mxu0 %v384
    %404 = vmatpush.bf16.msra.mxu0 %v383
    %405 = vmatpush.bf16.msra.mxu0 %v382
    %406 = vmatmul.bf16.gmra.mxu0 %v332
    %v407 = vpop.f32.mrf.mxu0
    %v408 = vadd.f32 0.0, %v407
    %v409 = vpop.f32.mrf.mxu0
    %v410 = vadd.f32 0.0, %v409
    %411 = vdwg.mxu0
    %v412 = vpack.c.bf16 %v410, %v408
    %v413 = vld [vmem:[#allocation7 + $0x2] sm:$0x1]
    %v414 = vperm.slane %v413, 0
    %415 = vmatpush.bf16.msra.mxu0 0
    %416 = vmatpush.bf16.msra.mxu0 0
    %417 = vmatpush.bf16.msra.mxu0 0
    %418 = vmatpush.bf16.msra.mxu0 0
    %419 = vmatpush.bf16.msra.mxu0 0
    %420 = vmatpush.bf16.msra.mxu0 0
    %421 = vmatpush.bf16.msra.mxu0 0
    %422 = vmatpush.bf16.msra.mxu0 %v412
    %423 = vmatmul.bf16.gmra.mxu0 %v215
    %v424 = vpop.f32.mrf.mxu0
    %v425 = vadd.f32 %v414, %v424
    %v426 = vpop.f32.mrf.mxu0
    %v427 = vadd.f32 %v414, %v426
    %428 = vdwg.mxu0
    %v429 = vmax.f32 %v425, 0.0
    %v430 = vmax.f32 %v427, 0.0
    %v431 = vpack.c.bf16 %v430, %v429
    %v432 = vld [vmem:[%s2] sm:$0x1]
    %v434 = vsel %vm213, %v432, 0
    %436 = vmatpush.bf16.msra.mxu0 0
    %437 = vmatpush.bf16.msra.mxu0 0
    %438 = vmatpush.bf16.msra.mxu0 0
    %439 = vmatpush.bf16.msra.mxu0 0
    %440 = vmatpush.bf16.msra.mxu0 0
    %441 = vmatpush.bf16.msra.mxu0 0
    %442 = vmatpush.bf16.msra.mxu0 0
    %443 = vmatpush.bf16.msra.mxu0 %v431
    %444 = vmatmul.bf16.gmra.mxu0 %v434
    %v445 = vpop.f32.mrf.mxu0
    %v446 = vadd.f32 0.0, %v445
    %v447 = vpop.f32.mrf.mxu0
    %448 = vdwg.mxu0
    %v449 = vpack.c.bf16 %v446, %v446
    %v450 = vld [vmem:[#allocation9] sm:$0xf]
    %v451 = vld [vmem:[#allocation9 + $0x4] sm:$0xf]
    %v452 = vld [vmem:[#allocation9 + $0x8] sm:$0xf]
    %v453 = vld [vmem:[#allocation9 + $0xc] sm:$0xf]
    %v454 = vld [vmem:[#allocation9 + $0x10] sm:$0xf]
    %v455 = vld [vmem:[#allocation9 + $0x14] sm:$0xf]
    %v456 = vld [vmem:[#allocation9 + $0x18] sm:$0xf]
    %v457 = vld [vmem:[#allocation9 + $0x1c] sm:$0xf]
    %v458 = vld [vmem:[#allocation9 + $0x20] sm:$0xf]
    %v459 = vld [vmem:[#allocation9 + $0x24] sm:$0xf]
    %v460 = vld [vmem:[#allocation9 + $0x28] sm:$0xf]
    %v461 = vld [vmem:[#allocation9 + $0x2c] sm:$0xf]
    %v462 = vld [vmem:[#allocation9 + $0x30] sm:$0xf]
    %v463 = vld [vmem:[#allocation9 + $0x34] sm:$0xf]
    %v464 = vld [vmem:[#allocation9 + $0x38] sm:$0xf]
    %v465 = vld [vmem:[#allocation9 + $0x3c] sm:$0xf]
    %v466 = vld [vmem:[#allocation10] sm:$0x1]
    %v467 = vperm.slane %v466, 0
    %v484 = vunpack.c.l.b16 %v450
    %v485 = vunpack.c.l.b16 %v451
    %v486 = vunpack.c.l.b16 %v452
    %v487 = vunpack.c.l.b16 %v453
    %v488 = vunpack.c.l.b16 %v454
    %v489 = vunpack.c.l.b16 %v455
    %v490 = vunpack.c.l.b16 %v456
    %v491 = vunpack.c.l.b16 %v457
    %v492 = vunpack.c.l.b16 %v458
    %v493 = vunpack.c.l.b16 %v459
    %v494 = vunpack.c.l.b16 %v460
    %v495 = vunpack.c.l.b16 %v461
    %v496 = vunpack.c.l.b16 %v462
    %v497 = vunpack.c.l.b16 %v463
    %v498 = vunpack.c.l.b16 %v464
    %v499 = vunpack.c.l.b16 %v465
    %v500 = vpack.c.b16 %v485, %v484
    %v501 = vpack.c.b16 %v487, %v486
    %v502 = vpack.c.b16 %v489, %v488
    %v503 = vpack.c.b16 %v491, %v490
    %v504 = vpack.c.b16 %v493, %v492
    %v505 = vpack.c.b16 %v495, %v494
    %v506 = vpack.c.b16 %v497, %v496
    %v507 = vpack.c.b16 %v499, %v498
    %516 = vmatpush.bf16.msra.mxu0 %v507
    %517 = vmatpush.bf16.msra.mxu0 %v506
    %518 = vmatpush.bf16.msra.mxu0 %v505
    %519 = vmatpush.bf16.msra.mxu0 %v504
    %520 = vmatpush.bf16.msra.mxu0 %v503
    %521 = vmatpush.bf16.msra.mxu0 %v502
    %522 = vmatpush.bf16.msra.mxu0 %v501
    %523 = vmatpush.bf16.msra.mxu0 %v500
    %524 = vmatmul.bf16.gmra.mxu0 %v449
    %v525 = vpop.f32.mrf.mxu0
    %v526 = vadd.f32 %v467, %v525
    %v527 = vpop.f32.mrf.mxu0
    %528 = vdwg.mxu0
    %v529 = vmax.f32 %v526, 0.0
    %v530 = vpack.c.bf16 %v529, %v529
    %s531 = scalar_lea.vmem [#allocation9], 64
    %v532 = vld [vmem:[%s531] sm:$0xf]
    %v533 = vld [vmem:[%s531 + $0x4] sm:$0xf]
    %v534 = vld [vmem:[%s531 + $0x8] sm:$0xf]
    %v535 = vld [vmem:[%s531 + $0xc] sm:$0xf]
    %v536 = vld [vmem:[%s531 + $0x10] sm:$0xf]
    %v537 = vld [vmem:[%s531 + $0x14] sm:$0xf]
    %v538 = vld [vmem:[%s531 + $0x18] sm:$0xf]
    %v539 = vld [vmem:[%s531 + $0x1c] sm:$0xf]
    %v540 = vld [vmem:[%s531 + $0x20] sm:$0xf]
    %v541 = vld [vmem:[%s531 + $0x24] sm:$0xf]
    %v542 = vld [vmem:[%s531 + $0x28] sm:$0xf]
    %v543 = vld [vmem:[%s531 + $0x2c] sm:$0xf]
    %v544 = vld [vmem:[%s531 + $0x30] sm:$0xf]
    %v545 = vld [vmem:[%s531 + $0x34] sm:$0xf]
    %v546 = vld [vmem:[%s531 + $0x38] sm:$0xf]
    %v547 = vld [vmem:[%s531 + $0x3c] sm:$0xf]
    %v548 = vld [vmem:[#allocation10 + $0x1] sm:$0x1]
    %v549 = vperm.slane %v548, 0
    %v566 = vunpack.c.l.b16 %v532
    %v567 = vunpack.c.l.b16 %v533
    %v568 = vunpack.c.l.b16 %v534
    %v569 = vunpack.c.l.b16 %v535
    %v570 = vunpack.c.l.b16 %v536
    %v571 = vunpack.c.l.b16 %v537
    %v572 = vunpack.c.l.b16 %v538
    %v573 = vunpack.c.l.b16 %v539
    %v574 = vunpack.c.l.b16 %v540
    %v575 = vunpack.c.l.b16 %v541
    %v576 = vunpack.c.l.b16 %v542
    %v577 = vunpack.c.l.b16 %v543
    %v578 = vunpack.c.l.b16 %v544
    %v579 = vunpack.c.l.b16 %v545
    %v580 = vunpack.c.l.b16 %v546
    %v581 = vunpack.c.l.b16 %v547
    %v582 = vpack.c.b16 %v567, %v566
    %v583 = vpack.c.b16 %v569, %v568
    %v584 = vpack.c.b16 %v571, %v570
    %v585 = vpack.c.b16 %v573, %v572
    %v586 = vpack.c.b16 %v575, %v574
    %v587 = vpack.c.b16 %v577, %v576
    %v588 = vpack.c.b16 %v579, %v578
    %v589 = vpack.c.b16 %v581, %v580
    %598 = vmatpush.bf16.msra.mxu0 %v589
    %599 = vmatpush.bf16.msra.mxu0 %v588
    %600 = vmatpush.bf16.msra.mxu0 %v587
    %601 = vmatpush.bf16.msra.mxu0 %v586
    %602 = vmatpush.bf16.msra.mxu0 %v585
    %603 = vmatpush.bf16.msra.mxu0 %v584
    %604 = vmatpush.bf16.msra.mxu0 %v583
    %605 = vmatpush.bf16.msra.mxu0 %v582
    %606 = vmatmul.bf16.gmra.mxu0 %v530
    %v607 = vpop.f32.mrf.mxu0
    %v608 = vadd.f32 %v549, %v607
    %v609 = vpop.f32.mrf.mxu0
    %610 = vdwg.mxu0
    %v611 = vmax.f32 %v608, 0.0
    %v612 = vpack.c.bf16 %v611, %v611
    %s613 = scalar_lea.vmem [#allocation9], 128
    %v614 = vld [vmem:[%s613] sm:$0xf]
    %v615 = vld [vmem:[%s613 + $0x4] sm:$0xf]
    %v616 = vld [vmem:[%s613 + $0x8] sm:$0xf]
    %v617 = vld [vmem:[%s613 + $0xc] sm:$0xf]
    %v618 = vld [vmem:[%s613 + $0x10] sm:$0xf]
    %v619 = vld [vmem:[%s613 + $0x14] sm:$0xf]
    %v620 = vld [vmem:[%s613 + $0x18] sm:$0xf]
    %v621 = vld [vmem:[%s613 + $0x1c] sm:$0xf]
    %v622 = vld [vmem:[%s613 + $0x20] sm:$0xf]
    %v623 = vld [vmem:[%s613 + $0x24] sm:$0xf]
    %v624 = vld [vmem:[%s613 + $0x28] sm:$0xf]
    %v625 = vld [vmem:[%s613 + $0x2c] sm:$0xf]
    %v626 = vld [vmem:[%s613 + $0x30] sm:$0xf]
    %v627 = vld [vmem:[%s613 + $0x34] sm:$0xf]
    %v628 = vld [vmem:[%s613 + $0x38] sm:$0xf]
    %v629 = vld [vmem:[%s613 + $0x3c] sm:$0xf]
    %v630 = vld [vmem:[#allocation10 + $0x2] sm:$0x1]
    %v631 = vperm.slane %v630, 0
    %v648 = vunpack.c.l.b16 %v614
    %v649 = vunpack.c.l.b16 %v615
    %v650 = vunpack.c.l.b16 %v616
    %v651 = vunpack.c.l.b16 %v617
    %v652 = vunpack.c.l.b16 %v618
    %v653 = vunpack.c.l.b16 %v619
    %v654 = vunpack.c.l.b16 %v620
    %v655 = vunpack.c.l.b16 %v621
    %v656 = vunpack.c.l.b16 %v622
    %v657 = vunpack.c.l.b16 %v623
    %v658 = vunpack.c.l.b16 %v624
    %v659 = vunpack.c.l.b16 %v625
    %v660 = vunpack.c.l.b16 %v626
    %v661 = vunpack.c.l.b16 %v627
    %v662 = vunpack.c.l.b16 %v628
    %v663 = vunpack.c.l.b16 %v629
    %v664 = vpack.c.b16 %v649, %v648
    %v665 = vpack.c.b16 %v651, %v650
    %v666 = vpack.c.b16 %v653, %v652
    %v667 = vpack.c.b16 %v655, %v654
    %v668 = vpack.c.b16 %v657, %v656
    %v669 = vpack.c.b16 %v659, %v658
    %v670 = vpack.c.b16 %v661, %v660
    %v671 = vpack.c.b16 %v663, %v662
    %680 = vmatpush.bf16.msra.mxu0 %v671
    %681 = vmatpush.bf16.msra.mxu0 %v670
    %682 = vmatpush.bf16.msra.mxu0 %v669
    %683 = vmatpush.bf16.msra.mxu0 %v668
    %684 = vmatpush.bf16.msra.mxu0 %v667
    %685 = vmatpush.bf16.msra.mxu0 %v666
    %686 = vmatpush.bf16.msra.mxu0 %v665
    %687 = vmatpush.bf16.msra.mxu0 %v664
    %688 = vmatmul.bf16.gmra.mxu0 %v612
    %v689 = vpop.f32.mrf.mxu0
    %v690 = vadd.f32 %v631, %v689
    %v691 = vpop.f32.mrf.mxu0
    %692 = vdwg.mxu0
    %v693 = vmax.f32 %v690, 0.0
    %v694 = vpack.c.bf16 %v693, %v693
    %s695 = scalar_lea.vmem [#allocation9], 192
    %v696 = vld [vmem:[%s695] sm:$0xf]
    %v697 = vld [vmem:[%s695 + $0x4] sm:$0xf]
    %v698 = vld [vmem:[%s695 + $0x8] sm:$0xf]
    %v699 = vld [vmem:[%s695 + $0xc] sm:$0xf]
    %v700 = vld [vmem:[%s695 + $0x10] sm:$0xf]
    %v701 = vld [vmem:[%s695 + $0x14] sm:$0xf]
    %v702 = vld [vmem:[%s695 + $0x18] sm:$0xf]
    %v703 = vld [vmem:[%s695 + $0x1c] sm:$0xf]
    %v704 = vld [vmem:[%s695 + $0x20] sm:$0xf]
    %v705 = vld [vmem:[%s695 + $0x24] sm:$0xf]
    %v706 = vld [vmem:[%s695 + $0x28] sm:$0xf]
    %v707 = vld [vmem:[%s695 + $0x2c] sm:$0xf]
    %v708 = vld [vmem:[%s695 + $0x30] sm:$0xf]
    %v709 = vld [vmem:[%s695 + $0x34] sm:$0xf]
    %v710 = vld [vmem:[%s695 + $0x38] sm:$0xf]
    %v711 = vld [vmem:[%s695 + $0x3c] sm:$0xf]
    %v712 = vld [vmem:[#allocation10 + $0x3] sm:$0x1]
    %v713 = vperm.slane %v712, 0
    %v730 = vunpack.c.l.b16 %v696
    %v731 = vunpack.c.l.b16 %v697
    %v732 = vunpack.c.l.b16 %v698
    %v733 = vunpack.c.l.b16 %v699
    %v734 = vunpack.c.l.b16 %v700
    %v735 = vunpack.c.l.b16 %v701
    %v736 = vunpack.c.l.b16 %v702
    %v737 = vunpack.c.l.b16 %v703
    %v738 = vunpack.c.l.b16 %v704
    %v739 = vunpack.c.l.b16 %v705
    %v740 = vunpack.c.l.b16 %v706
    %v741 = vunpack.c.l.b16 %v707
    %v742 = vunpack.c.l.b16 %v708
    %v743 = vunpack.c.l.b16 %v709
    %v744 = vunpack.c.l.b16 %v710
    %v745 = vunpack.c.l.b16 %v711
    %v746 = vpack.c.b16 %v731, %v730
    %v747 = vpack.c.b16 %v733, %v732
    %v748 = vpack.c.b16 %v735, %v734
    %v749 = vpack.c.b16 %v737, %v736
    %v750 = vpack.c.b16 %v739, %v738
    %v751 = vpack.c.b16 %v741, %v740
    %v752 = vpack.c.b16 %v743, %v742
    %v753 = vpack.c.b16 %v745, %v744
    %762 = vmatpush.bf16.msra.mxu0 %v753
    %763 = vmatpush.bf16.msra.mxu0 %v752
    %764 = vmatpush.bf16.msra.mxu0 %v751
    %765 = vmatpush.bf16.msra.mxu0 %v750
    %766 = vmatpush.bf16.msra.mxu0 %v749
    %767 = vmatpush.bf16.msra.mxu0 %v748
    %768 = vmatpush.bf16.msra.mxu0 %v747
    %769 = vmatpush.bf16.msra.mxu0 %v746
    %770 = vmatmul.bf16.gmra.mxu0 %v694
    %v771 = vpop.f32.mrf.mxu0
    %v772 = vadd.f32 %v713, %v771
    %v773 = vpop.f32.mrf.mxu0
    %774 = vdwg.mxu0
    %v775 = vmax.f32 %v772, 0.0
    %v776 = vpack.c.bf16 %v775, %v775
    %s777 = scalar_lea.vmem [#allocation9], 256
    %v778 = vld [vmem:[%s777] sm:$0xf]
    %v779 = vld [vmem:[%s777 + $0x4] sm:$0xf]
    %v780 = vld [vmem:[%s777 + $0x8] sm:$0xf]
    %v781 = vld [vmem:[%s777 + $0xc] sm:$0xf]
    %v782 = vld [vmem:[%s777 + $0x10] sm:$0xf]
    %v783 = vld [vmem:[%s777 + $0x14] sm:$0xf]
    %v784 = vld [vmem:[%s777 + $0x18] sm:$0xf]
    %v785 = vld [vmem:[%s777 + $0x1c] sm:$0xf]
    %v786 = vld [vmem:[%s777 + $0x20] sm:$0xf]
    %v787 = vld [vmem:[%s777 + $0x24] sm:$0xf]
    %v788 = vld [vmem:[%s777 + $0x28] sm:$0xf]
    %v789 = vld [vmem:[%s777 + $0x2c] sm:$0xf]
    %v790 = vld [vmem:[%s777 + $0x30] sm:$0xf]
    %v791 = vld [vmem:[%s777 + $0x34] sm:$0xf]
    %v792 = vld [vmem:[%s777 + $0x38] sm:$0xf]
    %v793 = vld [vmem:[%s777 + $0x3c] sm:$0xf]
    %v794 = vld [vmem:[#allocation10 + $0x4] sm:$0x1]
    %v795 = vperm.slane %v794, 0
    %v812 = vunpack.c.l.b16 %v778
    %v813 = vunpack.c.l.b16 %v779
    %v814 = vunpack.c.l.b16 %v780
    %v815 = vunpack.c.l.b16 %v781
    %v816 = vunpack.c.l.b16 %v782
    %v817 = vunpack.c.l.b16 %v783
    %v818 = vunpack.c.l.b16 %v784
    %v819 = vunpack.c.l.b16 %v785
    %v820 = vunpack.c.l.b16 %v786
    %v821 = vunpack.c.l.b16 %v787
    %v822 = vunpack.c.l.b16 %v788
    %v823 = vunpack.c.l.b16 %v789
    %v824 = vunpack.c.l.b16 %v790
    %v825 = vunpack.c.l.b16 %v791
    %v826 = vunpack.c.l.b16 %v792
    %v827 = vunpack.c.l.b16 %v793
    %v828 = vpack.c.b16 %v813, %v812
    %v829 = vpack.c.b16 %v815, %v814
    %v830 = vpack.c.b16 %v817, %v816
    %v831 = vpack.c.b16 %v819, %v818
    %v832 = vpack.c.b16 %v821, %v820
    %v833 = vpack.c.b16 %v823, %v822
    %v834 = vpack.c.b16 %v825, %v824
    %v835 = vpack.c.b16 %v827, %v826
    %844 = vmatpush.bf16.msra.mxu0 %v835
    %845 = vmatpush.bf16.msra.mxu0 %v834
    %846 = vmatpush.bf16.msra.mxu0 %v833
    %847 = vmatpush.bf16.msra.mxu0 %v832
    %848 = vmatpush.bf16.msra.mxu0 %v831
    %849 = vmatpush.bf16.msra.mxu0 %v830
    %850 = vmatpush.bf16.msra.mxu0 %v829
    %851 = vmatpush.bf16.msra.mxu0 %v828
    %852 = vmatmul.bf16.gmra.mxu0 %v776
    %v853 = vpop.f32.mrf.mxu0
    %v854 = vadd.f32 %v795, %v853
    %v855 = vpop.f32.mrf.mxu0
    %856 = vdwg.mxu0
    %v857 = vmax.f32 %v854, 0.0
    %v858 = vpack.c.bf16 %v857, %v857
    %s859 = scalar_lea.vmem [#allocation9], 320
    %v860 = vld [vmem:[%s859] sm:$0xf]
    %v861 = vld [vmem:[%s859 + $0x4] sm:$0xf]
    %v862 = vld [vmem:[%s859 + $0x8] sm:$0xf]
    %v863 = vld [vmem:[%s859 + $0xc] sm:$0xf]
    %v864 = vld [vmem:[%s859 + $0x10] sm:$0xf]
    %v865 = vld [vmem:[%s859 + $0x14] sm:$0xf]
    %v866 = vld [vmem:[%s859 + $0x18] sm:$0xf]
    %v867 = vld [vmem:[%s859 + $0x1c] sm:$0xf]
    %v868 = vld [vmem:[%s859 + $0x20] sm:$0xf]
    %v869 = vld [vmem:[%s859 + $0x24] sm:$0xf]
    %v870 = vld [vmem:[%s859 + $0x28] sm:$0xf]
    %v871 = vld [vmem:[%s859 + $0x2c] sm:$0xf]
    %v872 = vld [vmem:[%s859 + $0x30] sm:$0xf]
    %v873 = vld [vmem:[%s859 + $0x34] sm:$0xf]
    %v874 = vld [vmem:[%s859 + $0x38] sm:$0xf]
    %v875 = vld [vmem:[%s859 + $0x3c] sm:$0xf]
    %v876 = vld [vmem:[#allocation10 + $0x5] sm:$0x1]
    %v877 = vperm.slane %v876, 0
    %v894 = vunpack.c.l.b16 %v860
    %v895 = vunpack.c.l.b16 %v861
    %v896 = vunpack.c.l.b16 %v862
    %v897 = vunpack.c.l.b16 %v863
    %v898 = vunpack.c.l.b16 %v864
    %v899 = vunpack.c.l.b16 %v865
    %v900 = vunpack.c.l.b16 %v866
    %v901 = vunpack.c.l.b16 %v867
    %v902 = vunpack.c.l.b16 %v868
    %v903 = vunpack.c.l.b16 %v869
    %v904 = vunpack.c.l.b16 %v870
    %v905 = vunpack.c.l.b16 %v871
    %v906 = vunpack.c.l.b16 %v872
    %v907 = vunpack.c.l.b16 %v873
    %v908 = vunpack.c.l.b16 %v874
    %v909 = vunpack.c.l.b16 %v875
    %v910 = vpack.c.b16 %v895, %v894
    %v911 = vpack.c.b16 %v897, %v896
    %v912 = vpack.c.b16 %v899, %v898
    %v913 = vpack.c.b16 %v901, %v900
    %v914 = vpack.c.b16 %v903, %v902
    %v915 = vpack.c.b16 %v905, %v904
    %v916 = vpack.c.b16 %v907, %v906
    %v917 = vpack.c.b16 %v909, %v908
    %926 = vmatpush.bf16.msra.mxu0 %v917
    %927 = vmatpush.bf16.msra.mxu0 %v916
    %928 = vmatpush.bf16.msra.mxu0 %v915
    %929 = vmatpush.bf16.msra.mxu0 %v914
    %930 = vmatpush.bf16.msra.mxu0 %v913
    %931 = vmatpush.bf16.msra.mxu0 %v912
    %932 = vmatpush.bf16.msra.mxu0 %v911
    %933 = vmatpush.bf16.msra.mxu0 %v910
    %934 = vmatmul.bf16.gmra.mxu0 %v858
    %v935 = vpop.f32.mrf.mxu0
    %v936 = vadd.f32 %v877, %v935
    %v937 = vpop.f32.mrf.mxu0
    %938 = vdwg.mxu0
    %939 = vst [vmem:[%s7] sm:$0x3] %v936
    // Predicated region
    $region54: #{gcn_forward.1} parent=1 // pred_check
      _
    $region55: #{gcn_forward.1} parent=1 // pred_check_branch
      %941 = sbr.rel (0) target = $region57
    $region56: #{gcn_forward.1} parent=1 // pred_region
      _
    $region57: #{gcn_forward.1} parent=1 // pred_fallthru
      _
    // Predicated region
    $region58: #{gcn_forward.1} parent=1 // pred_check
      _
    $region59: #{gcn_forward.1} parent=1 // pred_check_branch
      %943 = sbr.rel (0) target = $region61
    $region60: #{gcn_forward.1} parent=1 // pred_region
      _
    $region61: #{gcn_forward.1} parent=1 // pred_fallthru
      _
    %944 = vsyncpa [#allocation3], 1
    %945 = vsyncpa [#allocation5], 1
    %946 = vsyncpa [#allocation8], 1
    %947 = vsyncpa [#allocation11], 1

</llo_original>
